<compile_context>
chip_gen: v7x
topology: tpu7x:2x2x1
jax: 0.10.0
libtpu: 0.0.40
codegen_flags: <defaults>
</compile_context>

<pallas_src>
import functools
import math

import jax
import jax.numpy as jnp
from jax.experimental import pallas as pl
from jax.experimental.pallas import tpu as pltpu

NUM_HEADS = 4
# Explicit VMEM budget: fits v7x's 64 MiB with headroom, fine on v5e/v6e.
_VMEM_LIMIT = 48 * 1024 * 1024


def _pick_tile(dim, preferred):
    """Largest `preferred` tile that evenly divides `dim`, else full dim."""
    return preferred if dim % preferred == 0 else dim


# -----------------------------------------------------------------------------
# Kernel 1: flash attention + per-head prob pruning (== `prune_dropout` hook)
# -----------------------------------------------------------------------------
def _attn_head_prune_kernel(num_head, scale,
                            q_ref, k_ref, v_ref, bias_ref, hmask_ref,
                            o_ref,
                            m_ref, l_ref, acc_ref, p_ref):
    h = pl.program_id(1)
    ki = pl.program_id(3)

    @pl.when(ki == 0)
    def _():
        m_ref[...] = jnp.full_like(m_ref, -jnp.inf)
        l_ref[...] = jnp.zeros_like(l_ref)
        acc_ref[...] = jnp.zeros_like(acc_ref)

    q = q_ref[...]                                   # (TQ, D) bf16
    k = k_ref[...]                                   # (TK, D) bf16
    # scores in fp32 (MXU accumulates fp32); softmax math stays fp32.
    s = jax.lax.dot_general(q, k, (((1,), (1,)), ((), ())),
                            preferred_element_type=jnp.float32)
    s = s * scale + bias_ref[...]                    # bias: (1, TK) fp32

    m_prev = m_ref[...]
    m_new = jnp.maximum(m_prev, s.max(axis=-1, keepdims=True))
    alpha = jnp.exp(m_prev - m_new)
    p = jnp.exp(s - m_new)                           # unnormalized probs, fp32

    # Denominator uses the *unmasked* probs (the hook does not renormalize).
    l_ref[...] = alpha * l_ref[...] + p.sum(axis=-1, keepdims=True)
    m_ref[...] = m_new

    p_ref[...] = p
    # Only the pruned head pays the masking multiply (num_head is static).
    @pl.when(h == num_head)
    def _():
        p_ref[...] = p_ref[...] * hmask_ref[...]

    acc_ref[...] = alpha * acc_ref[...] + jax.lax.dot_general(
        p_ref[...].astype(v_ref.dtype), v_ref[...],
        (((1,), (0,)), ((), ())), preferred_element_type=jnp.float32)

    @pl.when(ki == pl.num_programs(3) - 1)
    def _():
        inv_l = pl.reciprocal(l_ref[...], approx=True)   # EUP slot, ~free
        o_ref[...] = (acc_ref[...] * inv_l).astype(o_ref.dtype)


def attention_with_head_prune(q, k, v, attn_bias, head_mask, num_head):
    """q,k,v: [B, NH, S, D] bf16; attn_bias: [B, S] fp32; head_mask: [S, S]."""
    B, NH, S, D = q.shape
    TQ = _pick_tile(S, 128)
    TK = _pick_tile(S, 128)
    scale = 1.0 / math.sqrt(D)
    bias3 = attn_bias.reshape(B, 1, S).astype(jnp.float32)   # no jnp.repeat
    hmask = head_mask.astype(jnp.float32)

    kern = functools.partial(_attn_head_prune_kernel, int(num_head), scale)
    out = pl.pallas_call(
        kern,
        out_shape=jax.ShapeDtypeStruct((B, NH, S, D), jnp.float32),
        grid=(B, NH, S // TQ, S // TK),
        in_specs=[
            pl.BlockSpec((None, None, TQ, D), lambda b, h, qi, ki: (b, h, qi, 0)),
            pl.BlockSpec((None, None, TK, D), lambda b, h, qi, ki: (b, h, ki, 0)),
            pl.BlockSpec((None, None, TK, D), lambda b, h, qi, ki: (b, h, ki, 0)),
            # bias kept [B, 1, S]: same block for every head (no NHx DMA).
            pl.BlockSpec((None, 1, TK), lambda b, h, qi, ki: (b, 0, ki)),
            pl.BlockSpec((TQ, TK), lambda b, h, qi, ki: (qi, ki)),
        ],
        out_specs=pl.BlockSpec((None, None, TQ, D),
                               lambda b, h, qi, ki: (b, h, qi, 0)),
        scratch_shapes=[
            pltpu.VMEM((TQ, 1), jnp.float32),     # running max m
            pltpu.VMEM((TQ, 1), jnp.float32),     # running sum l
            pltpu.VMEM((TQ, D), jnp.float32),     # output accumulator
            pltpu.VMEM((TQ, TK), jnp.float32),    # probs tile (maskable)
        ],
        compiler_params=pltpu.CompilerParams(
            dimension_semantics=("parallel", "parallel", "parallel", "arbitrary"),
            vmem_limit_bytes=_VMEM_LIMIT),
    )(q, k, v, bias3, hmask)
    return out


# -----------------------------------------------------------------------------
# Kernel 2: tiled dense fused with output pruning (== `prune_outputs_hook`)
# -----------------------------------------------------------------------------
def _linear_prune_kernel(x_ref, w_ref, b_ref, mask_ref, o_ref):
    y = jnp.dot(x_ref[...], w_ref[...], preferred_element_type=jnp.float32)
    y = y + b_ref[...]
    o_ref[...] = (y * mask_ref[...]).astype(o_ref.dtype)


def linear_with_output_prune(x, w, b, mask_sh):
    """x: [B, S, K] bf16; w: [K, H] bf16; b: [H]; mask_sh: [S, H] fp32."""
    B, S, K = x.shape
    H = w.shape[1]
    TS = _pick_tile(S, 256)
    # TODO(synk): tile K with an extra "arbitrary" grid axis for very large K.
    out = pl.pallas_call(
        _linear_prune_kernel,
        out_shape=jax.ShapeDtypeStruct((B, S, H), jnp.float32),
        grid=(B, S // TS),
        in_specs=[
            pl.BlockSpec((None, TS, K), lambda b_, si: (b_, si, 0)),
            pl.BlockSpec((K, H), lambda b_, si: (0, 0)),        # W resident
            pl.BlockSpec((1, H), lambda b_, si: (0, 0)),
            pl.BlockSpec((TS, H), lambda b_, si: (si, 0)),      # shared per batch
        ],
        out_specs=pl.BlockSpec((None, TS, H), lambda b_, si: (b_, si, 0)),
        compiler_params=pltpu.CompilerParams(
            dimension_semantics=("parallel", "parallel"),
            vmem_limit_bytes=_VMEM_LIMIT),
    )(x, w, b.reshape(1, H).astype(jnp.float32), mask_sh)
    return out


# -----------------------------------------------------------------------------
# Surrogate "PrunedModel.forward" (embeddings / projections are plain-JAX glue)
# -----------------------------------------------------------------------------
def pruned_model_forward(params, input_ids, token_type_ids, attention_mask,
                         prune_positions, head_mask, num_head):
    x = params["word_emb"][input_ids] + params["type_emb"][token_type_ids]
    B, S, H = x.shape
    D = H // NUM_HEADS

    def proj(w):
        return (x @ w).reshape(B, S, NUM_HEADS, D).transpose(0, 2, 1, 3)

    q = proj(params["wq"]).astype(jnp.bfloat16)
    k = proj(params["wk"]).astype(jnp.bfloat16)
    v = proj(params["wv"]).astype(jnp.bfloat16)
    attn_bias = (1.0 - attention_mask.astype(jnp.float32)) * -1e9   # [B, S]

    # hook: prune_dropout on 'attention_probs.<num_head>'
    ctx = attention_with_head_prune(q, k, v, attn_bias, head_mask, num_head)
    # TODO(synk): with head_dim >= 128 the attention out_spec can write a
    # lane-dense [B, S, H] layout directly and skip this transpose.
    ctx = ctx.transpose(0, 2, 1, 3).reshape(B, S, H)

    # hook: prune_outputs_hook — mask over output[0].numel() == S*H, shared
    # across batch elements (built once, never tiled to [B*S, H]).
    mask = jnp.ones((S * H,), jnp.float32)
    mask = mask.at[jnp.asarray(prune_positions, jnp.int32)].set(0.0)
    mask_sh = mask.reshape(S, H)

    out = linear_with_output_prune(ctx.astype(jnp.bfloat16),
                                   params["wo"].astype(jnp.bfloat16),
                                   params["bo"], mask_sh)
    return out


# Plain-JAX reference of the same surrogate forward (fp32) for a sanity check.
def _reference_forward(params, input_ids, token_type_ids, attention_mask,
                       prune_positions, head_mask, num_head):
    x = params["word_emb"][input_ids] + params["type_emb"][token_type_ids]
    B, S, H = x.shape
    D = H // NUM_HEADS

    def proj(w):
        return (x @ w).reshape(B, S, NUM_HEADS, D).transpose(0, 2, 1, 3)

    q, k, v = proj(params["wq"]), proj(params["wk"]), proj(params["wv"])
    bias = (1.0 - attention_mask.astype(jnp.float32)) * -1e9
    s = jnp.einsum("bhqd,bhkd->bhqk", q, k) / math.sqrt(D)
    s = s + bias[:, None, None, :]
    p = jax.nn.softmax(s, axis=-1)
    p = p.at[:, num_head].multiply(head_mask[None])          # no renorm
    ctx = jnp.einsum("bhqk,bhkd->bhqd", p, v)
    ctx = ctx.transpose(0, 2, 1, 3).reshape(B, S, H)
    mask = jnp.ones((S * H,), jnp.float32)
    mask = mask.at[jnp.asarray(prune_positions, jnp.int32)].set(0.0)
    return (ctx @ params["wo"] + params["bo"]) * mask.reshape(S, H)[None]


if __name__ == "__main__":
    B, S, H, VOCAB = 2, 8, 32, 16
    key = jax.random.PRNGKey(0)
    ks = jax.random.split(key, 8)
    params = {
        "word_emb": jax.random.normal(ks[0], (VOCAB, H), jnp.float32) * 0.1,
        "type_emb": jax.random.normal(ks[1], (2, H), jnp.float32) * 0.1,
        "wq": jax.random.normal(ks[2], (H, H), jnp.float32) * 0.1,
        "wk": jax.random.normal(ks[3], (H, H), jnp.float32) * 0.1,
        "wv": jax.random.normal(ks[4], (H, H), jnp.float32) * 0.1,
        "wo": jax.random.normal(ks[5], (H, H), jnp.float32) * 0.1,
        "bo": jax.random.normal(ks[6], (H,), jnp.float32) * 0.1,
    }
    input_ids = jax.random.randint(ks[7], (B, S), 0, VOCAB)
    token_type_ids = jnp.zeros((B, S), jnp.int32)
    attention_mask = jnp.ones((B, S), jnp.int32).at[1, 6:].set(0)

    # pruning config (deterministic, stand-in for `positions_per_module`)
    prune_positions = [0, 5, 33, 100, 200]               # into flattened [S*H]
    head_mask = jnp.ones((S, S), jnp.float32).at[:, 3].set(0.0)
    num_head = 1

    out = pruned_model_forward(params, input_ids, token_type_ids,
                               attention_mask, prune_positions, head_mask,
                               num_head)
    out = jax.block_until_ready(out)
    assert out.shape == (B, S, H)

    ref = _reference_forward(params, input_ids, token_type_ids, attention_mask,
                             prune_positions, head_mask, num_head)
    assert jnp.allclose(out, ref, atol=5e-2, rtol=5e-2), \
        float(jnp.max(jnp.abs(out - ref)))
    print("KERNEL_OK")
</pallas_src>

<mosaic_0001>
module attributes {stable_mosaic.version = 11 : i64} {
  func.func @_attn_head_prune_kernel(%arg0: i32, %arg1: i32, %arg2: i32, %arg3: i32, %arg4: memref<1x1x8x8xbf16, #tpu.memory_space<vmem>>, %arg5: memref<1x1x8x8xbf16, #tpu.memory_space<vmem>>, %arg6: memref<1x1x8x8xbf16, #tpu.memory_space<vmem>>, %arg7: memref<1x1x8xf32, #tpu.memory_space<vmem>>, %arg8: memref<8x8xf32, #tpu.memory_space<vmem>>, %arg9: memref<1x1x8x8xf32, #tpu.memory_space<vmem>>, %arg10: memref<8x1xf32, #tpu.memory_space<vmem>>, %arg11: memref<8x1xf32, #tpu.memory_space<vmem>>, %arg12: memref<8x8xf32, #tpu.memory_space<vmem>>, %arg13: memref<8x8xf32, #tpu.memory_space<vmem>>) attributes {dimension_semantics = [#tpu.dimension_semantics<parallel>, #tpu.dimension_semantics<parallel>, #tpu.dimension_semantics<parallel>, #tpu.dimension_semantics<arbitrary>], iteration_bounds = array<i64: 2, 4, 1, 1>, scalar_prefetch = 0 : i64, scratch_operands = 4 : i64, tpu.core_type = #tpu.core_type<tc>, window_params = [{transform_indices = @transform_0, window_bounds = array<i64: 1, 1, 8, 8>}, {transform_indices = @transform_1, window_bounds = array<i64: 1, 1, 8, 8>}, {transform_indices = @transform_2, window_bounds = array<i64: 1, 1, 8, 8>}, {transform_indices = @transform_3, window_bounds = array<i64: 1, 1, 8>}, {transform_indices = @transform_4, window_bounds = array<i64: 8, 8>}, {transform_indices = @transform_5, window_bounds = array<i64: 1, 1, 8, 8>}]} {
    %c0_i32 = arith.constant 0 : i32
    %0 = arith.cmpi eq, %arg3, %c0_i32 : i32
    %1 = arith.extui %0 : i1 to i32
    %c0_i32_0 = arith.constant 0 : i32
    %2 = arith.cmpi ne, %1, %c0_i32_0 : i32
    scf.if %2 {
      %cst_38 = arith.constant 0xFF800000 : f32
      %47 = vector.broadcast %cst_38 : f32 to vector<8x1xf32>
      %c0_39 = arith.constant 0 : index
      %c0_40 = arith.constant 0 : index
      %48 = vector.load %arg10[%c0_39, %c0_40] : memref<8x1xf32, #tpu.memory_space<vmem>>, vector<8x1xf32>
      tpu.vector_store %arg10[%c0_39, %c0_40], %47 {strides = array<i32>} : memref<8x1xf32, #tpu.memory_space<vmem>>, vector<8x1xf32>,
      %cst_41 = arith.constant 0.000000e+00 : f32
      %49 = vector.broadcast %cst_41 : f32 to vector<8x1xf32>
      %c0_42 = arith.constant 0 : index
      %c0_43 = arith.constant 0 : index
      %50 = vector.load %arg11[%c0_42, %c0_43] : memref<8x1xf32, #tpu.memory_space<vmem>>, vector<8x1xf32>
      tpu.vector_store %arg11[%c0_42, %c0_43], %49 {strides = array<i32>} : memref<8x1xf32, #tpu.memory_space<vmem>>, vector<8x1xf32>,
      %cst_44 = arith.constant 0.000000e+00 : f32
      %51 = vector.broadcast %cst_44 : f32 to vector<8x8xf32>
      %c0_45 = arith.constant 0 : index
      %c0_46 = arith.constant 0 : index
      %52 = vector.load %arg12[%c0_45, %c0_46] : memref<8x8xf32, #tpu.memory_space<vmem>>, vector<8x8xf32>
      tpu.vector_store %arg12[%c0_45, %c0_46], %51 {strides = array<i32>} : memref<8x8xf32, #tpu.memory_space<vmem>>, vector<8x8xf32>,
    } else {
    }
    %c0 = arith.constant 0 : index
    %c0_1 = arith.constant 0 : index
    %c0_2 = arith.constant 0 : index
    %c0_3 = arith.constant 0 : index
    %3 = vector.load %arg4[%c0, %c0_1, %c0_2, %c0_3] : memref<1x1x8x8xbf16, #tpu.memory_space<vmem>>, vector<1x1x8x8xbf16>
    %4 = vector.shape_cast %3 : vector<1x1x8x8xbf16> to vector<8x8xbf16>
    %c0_4 = arith.constant 0 : index
    %c0_5 = arith.constant 0 : index
    %c0_6 = arith.constant 0 : index
    %c0_7 = arith.constant 0 : index
    %5 = vector.load %arg5[%c0_4, %c0_5, %c0_6, %c0_7] : memref<1x1x8x8xbf16, #tpu.memory_space<vmem>>, vector<1x1x8x8xbf16>
    %6 = vector.shape_cast %5 : vector<1x1x8x8xbf16> to vector<8x8xbf16>
    %cst = arith.constant dense<0.000000e+00> : vector<8x8xf32>
    %7 = tpu.matmul %4, %6, %cst {dimension_numbers = #tpu.dot_dimension_numbers<[1], [1], [0], [0], [0, 0, 1, 0], [], []>} : vector<8x8xbf16>, vector<8x8xbf16>, vector<8x8xf32> -> vector<8x8xf32>
    %cst_8 = arith.constant 0.353553385 : f32
    %8 = vector.broadcast %cst_8 : f32 to vector<8x8xf32>
    %9 = arith.mulf %7, %8 : vector<8x8xf32>
    %c0_9 = arith.constant 0 : index
    %c0_10 = arith.constant 0 : index
    %c0_11 = arith.constant 0 : index
    %10 = vector.load %arg7[%c0_9, %c0_10, %c0_11] : memref<1x1x8xf32, #tpu.memory_space<vmem>>, vector<1x1x8xf32>
    %11 = vector.shape_cast %10 : vector<1x1x8xf32> to vector<1x8xf32>
    %12 = vector.broadcast %11 : vector<1x8xf32> to vector<8x8xf32>
    %13 = arith.addf %9, %12 : vector<8x8xf32>
    %c0_12 = arith.constant 0 : index
    %c0_13 = arith.constant 0 : index
    %14 = vector.load %arg10[%c0_12, %c0_13] : memref<8x1xf32, #tpu.memory_space<vmem>>, vector<8x1xf32>
    %cst_14 = arith.constant dense<0xFF800000> : vector<8xf32>
    %15 = vector.multi_reduction <maximumf>, %13, %cst_14 [1] : vector<8x8xf32> to vector<8xf32>
    %16 = vector.shape_cast %15 : vector<8xf32> to vector<8x1xf32>
    %17 = arith.maximumf %14, %16 : vector<8x1xf32>
    %18 = arith.subf %14, %17 : vector<8x1xf32>
    %19 = math.exp %18 : vector<8x1xf32>
    %20 = vector.broadcast %17 : vector<8x1xf32> to vector<8x8xf32>
    %21 = arith.subf %13, %20 : vector<8x8xf32>
    %22 = math.exp %21 : vector<8x8xf32>
    %c0_15 = arith.constant 0 : index
    %c0_16 = arith.constant 0 : index
    %23 = vector.load %arg11[%c0_15, %c0_16] : memref<8x1xf32, #tpu.memory_space<vmem>>, vector<8x1xf32>
    %24 = arith.mulf %19, %23 : vector<8x1xf32>
    %cst_17 = arith.constant dense<0.000000e+00> : vector<8xf32>
    %25 = vector.multi_reduction <add>, %22, %cst_17 [1] : vector<8x8xf32> to vector<8xf32>
    %26 = vector.shape_cast %25 : vector<8xf32> to vector<8x1xf32>
    %27 = arith.addf %24, %26 : vector<8x1xf32>
    %c0_18 = arith.constant 0 : index
    %c0_19 = arith.constant 0 : index
    %28 = vector.load %arg11[%c0_18, %c0_19] : memref<8x1xf32, #tpu.memory_space<vmem>>, vector<8x1xf32>
    tpu.vector_store %arg11[%c0_18, %c0_19], %27 {strides = array<i32>} : memref<8x1xf32, #tpu.memory_space<vmem>>, vector<8x1xf32>,
    %c0_20 = arith.constant 0 : index
    %c0_21 = arith.constant 0 : index
    %29 = vector.load %arg10[%c0_20, %c0_21] : memref<8x1xf32, #tpu.memory_space<vmem>>, vector<8x1xf32>
    tpu.vector_store %arg10[%c0_20, %c0_21], %17 {strides = array<i32>} : memref<8x1xf32, #tpu.memory_space<vmem>>, vector<8x1xf32>,
    %c0_22 = arith.constant 0 : index
    %c0_23 = arith.constant 0 : index
    %30 = vector.load %arg13[%c0_22, %c0_23] : memref<8x8xf32, #tpu.memory_space<vmem>>, vector<8x8xf32>
    tpu.vector_store %arg13[%c0_22, %c0_23], %22 {strides = array<i32>} : memref<8x8xf32, #tpu.memory_space<vmem>>, vector<8x8xf32>,
    %c1_i32 = arith.constant 1 : i32
    %31 = arith.cmpi eq, %arg1, %c1_i32 : i32
    %32 = arith.extui %31 : i1 to i32
    %c0_i32_24 = arith.constant 0 : i32
    %33 = arith.cmpi ne, %32, %c0_i32_24 : i32
    scf.if %33 {
      %c0_38 = arith.constant 0 : index
      %c0_39 = arith.constant 0 : index
      %47 = vector.load %arg13[%c0_38, %c0_39] : memref<8x8xf32, #tpu.memory_space<vmem>>, vector<8x8xf32>
      %c0_40 = arith.constant 0 : index
      %c0_41 = arith.constant 0 : index
      %48 = vector.load %arg8[%c0_40, %c0_41] : memref<8x8xf32, #tpu.memory_space<vmem>>, vector<8x8xf32>
      %49 = arith.mulf %47, %48 : vector<8x8xf32>
      %c0_42 = arith.constant 0 : index
      %c0_43 = arith.constant 0 : index
      %50 = vector.load %arg13[%c0_42, %c0_43] : memref<8x8xf32, #tpu.memory_space<vmem>>, vector<8x8xf32>
      tpu.vector_store %arg13[%c0_42, %c0_43], %49 {strides = array<i32>} : memref<8x8xf32, #tpu.memory_space<vmem>>, vector<8x8xf32>,
    } else {
    }
    %c0_25 = arith.constant 0 : index
    %c0_26 = arith.constant 0 : index
    %34 = vector.load %arg12[%c0_25, %c0_26] : memref<8x8xf32, #tpu.memory_space<vmem>>, vector<8x8xf32>
    %35 = vector.broadcast %19 : vector<8x1xf32> to vector<8x8xf32>
    %36 = arith.mulf %35, %34 : vector<8x8xf32>
    %c0_27 = arith.constant 0 : index
    %c0_28 = arith.constant 0 : index
    %37 = vector.load %arg13[%c0_27, %c0_28] : memref<8x8xf32, #tpu.memory_space<vmem>>, vector<8x8xf32>
    %38 = arith.truncf %37 : vector<8x8xf32> to vector<8x8xbf16>
    %c0_29 = arith.constant 0 : index
    %c0_30 = arith.constant 0 : index
    %c0_31 = arith.constant 0 : index
    %c0_32 = arith.constant 0 : index
    %39 = vector.load %arg6[%c0_29, %c0_30, %c0_31, %c0_32] : memref<1x1x8x8xbf16, #tpu.memory_space<vmem>>, vector<1x1x8x8xbf16>
    %40 = vector.shape_cast %39 : vector<1x1x8x8xbf16> to vector<8x8xbf16>
    %cst_33 = arith.constant dense<0.000000e+00> : vector<8x8xf32>
    %41 = tpu.matmul %38, %40, %cst_33 {dimension_numbers = #tpu.dot_dimension_numbers<[1], [0], [0], [1], [0, 0, 1, 1], [], []>} : vector<8x8xbf16>, vector<8x8xbf16>, vector<8x8xf32> -> vector<8x8xf32>
    %42 = arith.addf %36, %41 : vector<8x8xf32>
    %c0_34 = arith.constant 0 : index
    %c0_35 = arith.constant 0 : index
    %43 = vector.load %arg12[%c0_34, %c0_35] : memref<8x8xf32, #tpu.memory_space<vmem>>, vector<8x8xf32>
    tpu.vector_store %arg12[%c0_34, %c0_35], %42 {strides = array<i32>} : memref<8x8xf32, #tpu.memory_space<vmem>>, vector<8x8xf32>,
    %c0_i32_36 = arith.constant 0 : i32
    %44 = arith.cmpi eq, %arg3, %c0_i32_36 : i32
    %45 = arith.extui %44 : i1 to i32
    %c0_i32_37 = arith.constant 0 : i32
    %46 = arith.cmpi ne, %45, %c0_i32_37 : i32
    scf.if %46 {
      %c0_38 = arith.constant 0 : index
      %c0_39 = arith.constant 0 : index
      %47 = vector.load %arg11[%c0_38, %c0_39] : memref<8x1xf32, #tpu.memory_space<vmem>>, vector<8x1xf32>
      %48 = tpu.reciprocal %47 {approx = true} : vector<8x1xf32> -> vector<8x1xf32>
      %c0_40 = arith.constant 0 : index
      %c0_41 = arith.constant 0 : index
      %49 = vector.load %arg12[%c0_40, %c0_41] : memref<8x8xf32, #tpu.memory_space<vmem>>, vector<8x8xf32>
      %50 = vector.broadcast %48 : vector<8x1xf32> to vector<8x8xf32>
      %51 = arith.mulf %49, %50 : vector<8x8xf32>
      %c0_42 = arith.constant 0 : index
      %c0_43 = arith.constant 0 : index
      %c0_44 = arith.constant 0 : index
      %c0_45 = arith.constant 0 : index
      %52 = vector.load %arg9[%c0_42, %c0_43, %c0_44, %c0_45] : memref<1x1x8x8xf32, #tpu.memory_space<vmem>>, vector<1x1x8x8xf32>
      %53 = vector.shape_cast %52 : vector<1x1x8x8xf32> to vector<8x8xf32>
      %54 = vector.shape_cast %51 : vector<8x8xf32> to vector<1x1x8x8xf32>
      tpu.vector_store %arg9[%c0_42, %c0_43, %c0_44, %c0_45], %54 {strides = array<i32>} : memref<1x1x8x8xf32, #tpu.memory_space<vmem>>, vector<1x1x8x8xf32>,
    } else {
    }
    return
  }
  func.func @transform_0(%arg0: i32, %arg1: i32, %arg2: i32, %arg3: i32) -> (i32, i32, i32, i32) {
    %c0_i32 = arith.constant 0 : i32
    %c0_i32_0 = arith.constant 0 : i32
    return %arg0, %arg1, %arg2, %c0_i32 : i32, i32, i32, i32
  }
  func.func @transform_1(%arg0: i32, %arg1: i32, %arg2: i32, %arg3: i32) -> (i32, i32, i32, i32) {
    %c0_i32 = arith.constant 0 : i32
    %c0_i32_0 = arith.constant 0 : i32
    return %arg0, %arg1, %arg3, %c0_i32 : i32, i32, i32, i32
  }
  func.func @transform_2(%arg0: i32, %arg1: i32, %arg2: i32, %arg3: i32) -> (i32, i32, i32, i32) {
    %c0_i32 = arith.constant 0 : i32
    %c0_i32_0 = arith.constant 0 : i32
    return %arg0, %arg1, %arg3, %c0_i32 : i32, i32, i32, i32
  }
  func.func @transform_3(%arg0: i32, %arg1: i32, %arg2: i32, %arg3: i32) -> (i32, i32, i32) {
    %c0_i32 = arith.constant 0 : i32
    %c0_i32_0 = arith.constant 0 : i32
    return %arg0, %c0_i32, %arg3 : i32, i32, i32
  }
  func.func @transform_4(%arg0: i32, %arg1: i32, %arg2: i32, %arg3: i32) -> (i32, i32) {
    %c0_i32 = arith.constant 0 : i32
    return %arg2, %arg3 : i32, i32
  }
  func.func @transform_5(%arg0: i32, %arg1: i32, %arg2: i32, %arg3: i32) -> (i32, i32, i32, i32) {
    %c0_i32 = arith.constant 0 : i32
    %c0_i32_0 = arith.constant 0 : i32
    return %arg0, %arg1, %arg2, %c0_i32 : i32, i32, i32, i32
  }
}

</mosaic_0001>

<llo_original>
// kernel: tpu_custom_call.1
$region0: #{tpu_custom_call.1}
  #allocation0 [shape = 'u32[]', space=smem, size = 0x4, offset = 0x4, fixed_abs, tag = 'smem constant byte address 0x4 - core index']
  #allocation1 [shape = 'u32[144,128]{1,0:T(1,128)}', space=vmem, size = 0x12000, scoped, tag = 'internal scratch']
  #allocation2 [shape = 'f32[8,1]{1,0:T(8,128)}', space=vmem, size = 0x1000, scoped, tag = 'scratch operand']
  #allocation3 [shape = 'f32[8,1]{1,0:T(8,128)}', space=vmem, size = 0x1000, scoped, tag = 'scratch operand']
  #allocation4 [shape = 'f32[8,8]{1,0:T(8,128)}', space=vmem, size = 0x1000, scoped, tag = 'scratch operand']
  #allocation5 [shape = 'f32[8,8]{1,0:T(8,128)}', space=vmem, size = 0x1000, scoped, tag = 'scratch operand']
  %s0 = inlined_call_operand.hbm [shape: bf16[2,4,8,8], index: 0, kind: input, shape index: {}]
  %s1 = inlined_call_operand.hbm [shape: bf16[2,4,8,8], index: 1, kind: input, shape index: {}]
  %s2 = inlined_call_operand.hbm [shape: bf16[2,4,8,8], index: 2, kind: input, shape index: {}]
  %s3 = inlined_call_operand.vmem [shape: f32[2,1,8], index: 3, kind: input, shape index: {}]
  %s4 = inlined_call_operand.vmem [shape: f32[8,8], index: 4, kind: input, shape index: {}]
  %s5 = inlined_call_operand.hbm [shape: f32[2,4,8,8], index: 5, kind: output, shape index: {}]
  %s6 = sld [smem:[#allocation0]]
  $region77: #{tpu_custom_call.1} parent=0
    _
  %s8 = ssub.s32 1, %s6
  %s9 = scalar_select 0, %s8, %s6
  $region1: #{tpu_custom_call.1} parent=0
    #allocation6 [shape = 'u8[4096]{0}', space=vmem, size = 0x1000, scoped, tag = 'input window, operand 0']
    #allocation7 [shape = 's32[2]{0}', space=sflag, size = 0x8, scoped, tag = 'scoped memory for tpu_custom_call.1']
    #allocation8 [shape = 's32[2]{0}', space=sflag, size = 0x8, scoped, tag = 'scoped memory for tpu_custom_call.1']
    #allocation9 [shape = 'u8[4096]{0}', space=vmem, size = 0x1000, scoped, tag = 'input window, operand 1']
    #allocation10 [shape = 's32[2]{0}', space=sflag, size = 0x8, scoped, tag = 'scoped memory for tpu_custom_call.1']
    #allocation11 [shape = 'u8[4096]{0}', space=vmem, size = 0x1000, scoped, tag = 'input window, operand 2']
    #allocation12 [shape = 'u8[8192]{0}', space=vmem, size = 0x2000, scoped, tag = 'output window, operand 0']
    %10 = vsyncpa [#allocation7], 0
    %s11 = scalar_lea.sflag [#allocation7], 1
    %12 = vsyncpa %s11, 0
    %13 = vsyncpa [#allocation10], 0
    %s14 = scalar_lea.sflag [#allocation10], 1
    %15 = vsyncpa %s14, 0
    %16 = vsyncpa [#allocation8], 0
    %s17 = scalar_lea.sflag [#allocation8], 1
    %18 = vsyncpa %s17, 0
    loop: start=0, step=1, limit=10
    $region2: #{tpu_custom_call.1} parent=1 // loop_pre_header
      _
    $region3: #{tpu_custom_call.1} parent=1 // loop_header
      %s20 = sphi 0, %s24
      %p21 = scmp.ge.s32.totalorder %s20, 10
      %s27 = sphi 0, %s53
      %s28 = sphi 0, %s49
      %s29 = sphi 0, %s45
      %s30 = sphi 0, %s41
      %s31 = sphi 0, %s27
      %s32 = sphi 0, %s28
      %s33 = sphi 0, %s29
      %s34 = sphi 0, %s30
      %s35 = sphi 0, %s31
      %s36 = sphi 0, %s32
      %s37 = sphi 0, %s33
      %s38 = sphi 0, %s34
      %s60 = sphi 0, %s62
      %s63 = sphi 0, %s60
      %s64 = sphi 0, %s63
      %s80 = sphi 0, %s64
      %s90 = sphi 0, %s92
      %s93 = sphi 0, %s90
      %s94 = sphi 0, %s93
      %s110 = sphi 0, %s94
      %s120 = sphi 0, %s122
      %s123 = sphi 0, %s120
      %s124 = sphi 0, %s123
      %s140 = sphi 0, %s124
      %s148 = sphi 0, %s150
      %s151 = sphi 0, %s148
      %s152 = sphi 0, %s151
      %s168 = sphi 0, %s152
      %s176 = sphi 0, %s178
      %s179 = sphi 0, %s176
      %s180 = sphi 0, %s179
      %s196 = sphi 0, %s180
      %s206 = sphi 0, %s208
      %s209 = sphi 0, %s206
      %s210 = sphi 0, %s209
      %s226 = sphi 0, %s210
    $region4: #{tpu_custom_call.1} parent=1 // loop_header_branch
      %23 = sbr.rel (%p21) target = $region8
    $region5: #{tpu_custom_call.1} parent=1 // loop_body
      %s25 = ssub.s32 %s20, 1
      %s26 = ssub.s32 %s20, 2
      %s39 = sadd.s32 1, %s30
      %p40 = scmp.ge.s32.totalorder %s39, 1
      %s41 = scalar_select %p40, 0, %s39
      %s42 = sadd.s32 1, %s29
      %s43 = scalar_select %p40, %s42, %s29
      %p44 = scmp.ge.s32.totalorder %s43, 1
      %s45 = scalar_select %p44, 0, %s43
      %s46 = sadd.s32 1, %s28
      %s47 = scalar_select %p44, %s46, %s28
      %p48 = scmp.ge.s32.totalorder %s47, 4
      %s49 = scalar_select %p48, 0, %s47
      %s50 = sadd.s32 1, %s27
      %s51 = scalar_select %p48, %s50, %s27
      %p52 = scmp.ge.s32.totalorder %s51, 2
      %s53 = scalar_select %p52, 0, %s51
      %s54 = ssub.s32 %s27, %s53
      %s55 = ssub.s32 %s28, %s49
      %s56 = sor.u32 %s54, %s55
      %s57 = ssub.s32 %s29, %s45
      %s58 = sor.u32 %s56, %s57
      %p59 = scmp.eq.s32.totalorder %s58, 0
      %s61 = sadd.s32 %s60, 1
      %s62 = scalar_select %p59, %s60, %s61
      %p65 = pneg %p59
      %p66 = scmp.eq.s32.totalorder %s20, 7
      %p67 = por %p65, %p66
      %p68 = scmp.ne.s32.totalorder %s60, %s63
      %p69 = scmp.eq.s32.totalorder %s20, 0
      %p70 = por %p68, %p69
      %p71 = scmp.ne.s32.totalorder %s60, %s63
      %p72 = scmp.eq.s32.totalorder %s25, 7
      %p73 = por %p71, %p72
      %p74 = scmp.ne.s32.totalorder %s63, %s64
      %p75 = scmp.eq.s32.totalorder %s25, 0
      %p76 = por %p74, %p75
      %p77 = scmp.ne.s32.totalorder %s63, %s64
      %p78 = scmp.eq.s32.totalorder %s26, 7
      %p79 = por %p77, %p78
      %p81 = scmp.ne.s32.totalorder %s64, %s80
      %p82 = scmp.eq.s32.totalorder %s26, 0
      %p83 = por %p81, %p82
      %s84 = ssub.s32 %s27, %s53
      %s85 = ssub.s32 %s28, %s49
      %s86 = sor.u32 %s84, %s85
      %s87 = ssub.s32 %s30, %s41
      %s88 = sor.u32 %s86, %s87
      %p89 = scmp.eq.s32.totalorder %s88, 0
      %s91 = sadd.s32 %s90, 1
      %s92 = scalar_select %p89, %s90, %s91
      %p95 = pneg %p89
      %p96 = scmp.eq.s32.totalorder %s20, 7
      %p97 = por %p95, %p96
      %p98 = scmp.ne.s32.totalorder %s90, %s93
      %p99 = scmp.eq.s32.totalorder %s20, 0
      %p100 = por %p98, %p99
      %p101 = scmp.ne.s32.totalorder %s90, %s93
      %p102 = scmp.eq.s32.totalorder %s25, 7
      %p103 = por %p101, %p102
      %p104 = scmp.ne.s32.totalorder %s93, %s94
      %p105 = scmp.eq.s32.totalorder %s25, 0
      %p106 = por %p104, %p105
      %p107 = scmp.ne.s32.totalorder %s93, %s94
      %p108 = scmp.eq.s32.totalorder %s26, 7
      %p109 = por %p107, %p108
      %p111 = scmp.ne.s32.totalorder %s94, %s110
      %p112 = scmp.eq.s32.totalorder %s26, 0
      %p113 = por %p111, %p112
      %s114 = ssub.s32 %s27, %s53
      %s115 = ssub.s32 %s28, %s49
      %s116 = sor.u32 %s114, %s115
      %s117 = ssub.s32 %s30, %s41
      %s118 = sor.u32 %s116, %s117
      %p119 = scmp.eq.s32.totalorder %s118, 0
      %s121 = sadd.s32 %s120, 1
      %s122 = scalar_select %p119, %s120, %s121
      %p125 = pneg %p119
      %p126 = scmp.eq.s32.totalorder %s20, 7
      %p127 = por %p125, %p126
      %p128 = scmp.ne.s32.totalorder %s120, %s123
      %p129 = scmp.eq.s32.totalorder %s20, 0
      %p130 = por %p128, %p129
      %p131 = scmp.ne.s32.totalorder %s120, %s123
      %p132 = scmp.eq.s32.totalorder %s25, 7
      %p133 = por %p131, %p132
      %p134 = scmp.ne.s32.totalorder %s123, %s124
      %p135 = scmp.eq.s32.totalorder %s25, 0
      %p136 = por %p134, %p135
      %p137 = scmp.ne.s32.totalorder %s123, %s124
      %p138 = scmp.eq.s32.totalorder %s26, 7
      %p139 = por %p137, %p138
      %p141 = scmp.ne.s32.totalorder %s124, %s140
      %p142 = scmp.eq.s32.totalorder %s26, 0
      %p143 = por %p141, %p142
      %s144 = ssub.s32 %s27, %s53
      %s145 = ssub.s32 %s30, %s41
      %s146 = sor.u32 %s144, %s145
      %p147 = scmp.eq.s32.totalorder %s146, 0
      %s149 = sadd.s32 %s148, 1
      %s150 = scalar_select %p147, %s148, %s149
      %p153 = pneg %p147
      %p154 = scmp.eq.s32.totalorder %s20, 7
      %p155 = por %p153, %p154
      %p156 = scmp.ne.s32.totalorder %s148, %s151
      %p157 = scmp.eq.s32.totalorder %s20, 0
      %p158 = por %p156, %p157
      %p159 = scmp.ne.s32.totalorder %s148, %s151
      %p160 = scmp.eq.s32.totalorder %s25, 7
      %p161 = por %p159, %p160
      %p162 = scmp.ne.s32.totalorder %s151, %s152
      %p163 = scmp.eq.s32.totalorder %s25, 0
      %p164 = por %p162, %p163
      %p165 = scmp.ne.s32.totalorder %s151, %s152
      %p166 = scmp.eq.s32.totalorder %s26, 7
      %p167 = por %p165, %p166
      %p169 = scmp.ne.s32.totalorder %s152, %s168
      %p170 = scmp.eq.s32.totalorder %s26, 0
      %p171 = por %p169, %p170
      %s172 = ssub.s32 %s29, %s45
      %s173 = ssub.s32 %s30, %s41
      %s174 = sor.u32 %s172, %s173
      %p175 = scmp.eq.s32.totalorder %s174, 0
      %s177 = sadd.s32 %s176, 1
      %s178 = scalar_select %p175, %s176, %s177
      %p181 = pneg %p175
      %p182 = scmp.eq.s32.totalorder %s20, 7
      %p183 = por %p181, %p182
      %p184 = scmp.ne.s32.totalorder %s176, %s179
      %p185 = scmp.eq.s32.totalorder %s20, 0
      %p186 = por %p184, %p185
      %p187 = scmp.ne.s32.totalorder %s176, %s179
      %p188 = scmp.eq.s32.totalorder %s25, 7
      %p189 = por %p187, %p188
      %p190 = scmp.ne.s32.totalorder %s179, %s180
      %p191 = scmp.eq.s32.totalorder %s25, 0
      %p192 = por %p190, %p191
      %p193 = scmp.ne.s32.totalorder %s179, %s180
      %p194 = scmp.eq.s32.totalorder %s26, 7
      %p195 = por %p193, %p194
      %p197 = scmp.ne.s32.totalorder %s180, %s196
      %p198 = scmp.eq.s32.totalorder %s26, 0
      %p199 = por %p197, %p198
      %s200 = ssub.s32 %s27, %s53
      %s201 = ssub.s32 %s28, %s49
      %s202 = sor.u32 %s200, %s201
      %s203 = ssub.s32 %s29, %s45
      %s204 = sor.u32 %s202, %s203
      %p205 = scmp.eq.s32.totalorder %s204, 0
      %s207 = sadd.s32 %s206, 1
      %s208 = scalar_select %p205, %s206, %s207
      %p211 = pneg %p205
      %p212 = scmp.eq.s32.totalorder %s20, 7
      %p213 = por %p211, %p212
      %p214 = scmp.ne.s32.totalorder %s206, %s209
      %p215 = scmp.eq.s32.totalorder %s20, 0
      %p216 = por %p214, %p215
      %p217 = scmp.ne.s32.totalorder %s206, %s209
      %p218 = scmp.eq.s32.totalorder %s25, 7
      %p219 = por %p217, %p218
      %p220 = scmp.ne.s32.totalorder %s209, %s210
      %p221 = scmp.eq.s32.totalorder %s25, 0
      %p222 = por %p220, %p221
      %p223 = scmp.ne.s32.totalorder %s209, %s210
      %p224 = scmp.eq.s32.totalorder %s26, 7
      %p225 = por %p223, %p224
      %p227 = scmp.ne.s32.totalorder %s210, %s226
      %p228 = scmp.eq.s32.totalorder %s26, 0
      %p229 = por %p227, %p228
      %p230 = scmp.le.s32.totalorder 1, %s20
      %p231 = scmp.lt.s32.totalorder %s20, 9
      %p232 = pnand %p230, %p231
      %p233 = pneg %p232
      // Predicated region
      $region9: #{tpu_custom_call.1} parent=5 // pred_check
        _
      $region10: #{tpu_custom_call.1} parent=5 // pred_check_branch
        %235 = sbr.rel (%p232) target = $region12
      $region11: #{tpu_custom_call.1} parent=5 // pred_region
        %s236 = ssub.s32 %s20, 1
        // Predicated region
        $region13: #{tpu_custom_call.1} parent=11 // pred_check
          %p237 = pneg %p192
        $region14: #{tpu_custom_call.1} parent=11 // pred_check_branch
          %239 = sbr.rel (%p237) target = $region16
        $region15: #{tpu_custom_call.1} parent=11 // pred_region
          %p240 = scmp.lt.s32.totalorder %s33, 0
          %s241 = scalar_select %p240, %s33, 0
          %p242 = scmp.lt.s32.totalorder %s34, 0
          %s243 = scalar_select %p242, %s34, 0
          %s244 = sadd.s32 %s243, %s241
          %s245 = smul.addr %s244, 8
          %s246 = scalar_lea.vmem %s4, %s245
        $region16: #{tpu_custom_call.1} parent=11 // pred_fallthru
          _
      $region12: #{tpu_custom_call.1} parent=5 // pred_fallthru
        _
      %p247 = scmp.lt.s32.totalorder %s20, 8
      // Predicated region
      $region17: #{tpu_custom_call.1} parent=5 // pred_check
        %p248 = pneg %p247
      $region18: #{tpu_custom_call.1} parent=5 // pred_check_branch
        %250 = sbr.rel (%p248) target = $region20
      $region19: #{tpu_custom_call.1} parent=5 // pred_region
        // Predicated region
        $region21: #{tpu_custom_call.1} parent=19 // pred_check
          %p251 = pneg %p70
        $region22: #{tpu_custom_call.1} parent=19 // pred_check_branch
          %253 = sbr.rel (%p251) target = $region24
        $region23: #{tpu_custom_call.1} parent=19 // pred_region
          %s254 = sand.u32 %s60, 1
          %s255 = scalar_lea.sflag [#allocation7], %s254
          %s256 = sand.u32 %s60, 1
          %s257 = smul.addr %s256, 4
          %s258 = scalar_lea.vmem [#allocation6], %s257
          %s260 = ssub.s32 64, 64
          %261 = vsyncadd %s255, %s260
          %s262 = sadd.s32 %s29, %s28
          %s263 = smul.addr %s27, 4
          %s264 = sadd.s32 %s262, %s263
          %s265 = smul.addr %s264, 64
          %s266 = scalar_lea.hbm %s0, %s265
          %s268 = sshll.u32 %s258, 4
          %s269 = int_to_ptr.vmem [resolvable:$true] %s268
          %271 = dma.hbm_to_vmem [thread:$0]  %s266, 64, %s269, %s255
        $region24: #{tpu_custom_call.1} parent=19 // pred_fallthru
          _
        // Predicated region
        $region25: #{tpu_custom_call.1} parent=19 // pred_check
          %p272 = pneg %p100
        $region26: #{tpu_custom_call.1} parent=19 // pred_check_branch
          %274 = sbr.rel (%p272) target = $region28
        $region27: #{tpu_custom_call.1} parent=19 // pred_region
          %s275 = sand.u32 %s20, 1
          %s276 = scalar_lea.sflag [#allocation10], %s275
          %s277 = sand.u32 %s90, 1
          %s278 = smul.addr %s277, 4
          %s279 = scalar_lea.vmem [#allocation9], %s278
          %s281 = ssub.s32 64, 64
          %282 = vsyncadd %s276, %s281
          %s283 = sadd.s32 %s30, %s28
          %s284 = smul.addr %s27, 4
          %s285 = sadd.s32 %s283, %s284
          %s286 = smul.addr %s285, 64
          %s287 = scalar_lea.hbm %s1, %s286
          %s289 = sshll.u32 %s279, 4
          %s290 = int_to_ptr.vmem [resolvable:$true] %s289
          %292 = dma.hbm_to_vmem [thread:$0]  %s287, 64, %s290, %s276
        $region28: #{tpu_custom_call.1} parent=19 // pred_fallthru
          _
        // Predicated region
        $region29: #{tpu_custom_call.1} parent=19 // pred_check
          %p293 = pneg %p130
        $region30: #{tpu_custom_call.1} parent=19 // pred_check_branch
          %295 = sbr.rel (%p293) target = $region32
        $region31: #{tpu_custom_call.1} parent=19 // pred_region
          %s296 = sand.u32 %s20, 1
          %s297 = scalar_lea.sflag [#allocation10], %s296
          %s298 = sand.u32 %s120, 1
          %s299 = smul.addr %s298, 4
          %s300 = scalar_lea.vmem [#allocation11], %s299
          %s302 = ssub.s32 64, 64
          %303 = vsyncadd %s297, %s302
          %s304 = sadd.s32 %s30, %s28
          %s305 = smul.addr %s27, 4
          %s306 = sadd.s32 %s304, %s305
          %s307 = smul.addr %s306, 64
          %s308 = scalar_lea.hbm %s2, %s307
          %s310 = sshll.u32 %s300, 4
          %s311 = int_to_ptr.vmem [resolvable:$true] %s310
          %313 = dma.hbm_to_vmem [thread:$0]  %s308, 64, %s311, %s297
        $region32: #{tpu_custom_call.1} parent=19 // pred_fallthru
          _
        // Predicated region
        $region33: #{tpu_custom_call.1} parent=19 // pred_check
          %p314 = pneg %p158
        $region34: #{tpu_custom_call.1} parent=19 // pred_check_branch
          %316 = sbr.rel (%p314) target = $region36
        $region35: #{tpu_custom_call.1} parent=19 // pred_region
          %p317 = scmp.lt.s32.totalorder %s27, 1
          %s318 = scalar_select %p317, %s27, 1
          %p319 = scmp.lt.s32.totalorder %s30, 0
          %s320 = scalar_select %p319, %s30, 0
          %s321 = sadd.s32 %s320, %s318
          %s322 = scalar_lea.vmem %s3, %s321
        $region36: #{tpu_custom_call.1} parent=19 // pred_fallthru
          _
      $region20: #{tpu_custom_call.1} parent=5 // pred_fallthru
        _
      %p323 = scmp.le.s32.totalorder 1, %s20
      %p324 = scmp.lt.s32.totalorder %s20, 9
      %p325 = pnand %p323, %p324
      %p326 = pneg %p325
      // Predicated region
      $region37: #{tpu_custom_call.1} parent=5 // pred_check
        _
      $region38: #{tpu_custom_call.1} parent=5 // pred_check_branch
        %328 = sbr.rel (%p325) target = $region40
      $region39: #{tpu_custom_call.1} parent=5 // pred_region
        %s329 = ssub.s32 %s20, 1
        %s330 = sand.u32 %s63, 1
        %s331 = scalar_lea.sflag [#allocation7], %s330
        %s332 = sand.u32 %s63, 1
        %s333 = smul.addr %s332, 4
        %s334 = scalar_lea.vmem [#allocation6], %s333
        // Predicated region
        $region41: #{tpu_custom_call.1} parent=39 // pred_check
          %p335 = pneg %p76
        $region42: #{tpu_custom_call.1} parent=39 // pred_check_branch
          %337 = sbr.rel (%p335) target = $region44
        $region43: #{tpu_custom_call.1} parent=39 // pred_region
          %338 = dma.done %s331, 64
        $region44: #{tpu_custom_call.1} parent=39 // pred_fallthru
          _
        %s339 = sand.u32 %s25, 1
        %s340 = scalar_lea.sflag [#allocation10], %s339
        %s341 = sand.u32 %s93, 1
        %s342 = smul.addr %s341, 4
        %s343 = scalar_lea.vmem [#allocation9], %s342
        // Predicated region
        $region45: #{tpu_custom_call.1} parent=39 // pred_check
          %p344 = pneg %p106
        $region46: #{tpu_custom_call.1} parent=39 // pred_check_branch
          %346 = sbr.rel (%p344) target = $region48
        $region47: #{tpu_custom_call.1} parent=39 // pred_region
          %347 = dma.done %s340, 64
        $region48: #{tpu_custom_call.1} parent=39 // pred_fallthru
          _
        %s348 = sand.u32 %s25, 1
        %s349 = scalar_lea.sflag [#allocation10], %s348
        %s350 = sand.u32 %s123, 1
        %s351 = smul.addr %s350, 4
        %s352 = scalar_lea.vmem [#allocation11], %s351
        // Predicated region
        $region49: #{tpu_custom_call.1} parent=39 // pred_check
          %p353 = pneg %p136
        $region50: #{tpu_custom_call.1} parent=39 // pred_check_branch
          %355 = sbr.rel (%p353) target = $region52
        $region51: #{tpu_custom_call.1} parent=39 // pred_region
          %356 = dma.done %s349, 64
        $region52: #{tpu_custom_call.1} parent=39 // pred_fallthru
          _
        %s357 = sand.u32 %s63, 1
        %s358 = scalar_lea.sflag [#allocation7], %s357
        %s359 = sand.u32 %s63, 1
        %s360 = smul.addr %s359, 4
        %s361 = scalar_lea.vmem [#allocation6], %s360
        %p362 = pneg %p76
        %p363 = pneg %p73
        %s364 = sand.u32 %s25, 1
        %s365 = scalar_lea.sflag [#allocation10], %s364
        %s366 = sand.u32 %s93, 1
        %s367 = smul.addr %s366, 4
        %s368 = scalar_lea.vmem [#allocation9], %s367
        %p369 = pneg %p106
        %p370 = pneg %p103
        %s371 = sand.u32 %s25, 1
        %s372 = scalar_lea.sflag [#allocation10], %s371
        %s373 = sand.u32 %s123, 1
        %s374 = smul.addr %s373, 4
        %s375 = scalar_lea.vmem [#allocation11], %s374
        %p376 = pneg %p136
        %p377 = pneg %p133
        %p378 = scmp.lt.s32.totalorder %s31, 1
        %s379 = scalar_select %p378, %s31, 1
        %p380 = scmp.lt.s32.totalorder %s34, 0
        %s381 = scalar_select %p380, %s34, 0
        %s382 = sadd.s32 %s381, %s379
        %s383 = scalar_lea.vmem %s3, %s382
        %p384 = pneg %p164
        %p385 = pneg %p161
        %p386 = scmp.lt.s32.totalorder %s33, 0
        %s387 = scalar_select %p386, %s33, 0
        %p388 = scmp.lt.s32.totalorder %s34, 0
        %s389 = scalar_select %p388, %s34, 0
        %s390 = sadd.s32 %s389, %s387
        %s391 = smul.addr %s390, 8
        %s392 = scalar_lea.vmem %s4, %s391
        %p393 = pneg %p192
        %p394 = pneg %p189
        %p395 = pneg %p222
        %p396 = pneg %p219
        %s397 = sand.u32 %s209, 1
        %s398 = scalar_lea.sflag [#allocation8], %s397
        %s399 = sand.u32 %s209, 1
        %s400 = smul.addr %s399, 8
        %s401 = scalar_lea.vmem [#allocation12], %s400
        %p402 = scmp.lt.s32.totalorder %s31, 1
        %s403 = scalar_select %p402, %s31, 1
        %p404 = scmp.lt.s32.totalorder %s34, 0
        %s405 = scalar_select %p404, %s34, 0
        %s406 = sadd.s32 %s405, %s403
        %s407 = scalar_lea.vmem %s3, %s406
        %p408 = scmp.lt.s32.totalorder %s33, 0
        %s409 = scalar_select %p408, %s33, 0
        %p410 = scmp.lt.s32.totalorder %s34, 0
        %s411 = scalar_select %p410, %s34, 0
        %s412 = sadd.s32 %s411, %s409
        %s413 = smul.addr %s412, 8
        %s414 = scalar_lea.vmem %s4, %s413
        %p416 = scmp.eq.s32.totalorder %s34, 0
        // Predicated region
        $region53: #{tpu_custom_call.1} parent=39 // pred_check
          %p417 = pneg %p416
        $region54: #{tpu_custom_call.1} parent=39 // pred_check_branch
          %419 = sbr.rel (%p417) target = $region56
        $region55: #{tpu_custom_call.1} parent=39 // pred_region
          %vm420 = vcmask 7168
          %421 = vst.msk [vmem:[#allocation2] sm:$0xff] %vm420, -inf
          %422 = vst.msk [vmem:[#allocation3] sm:$0xff] %vm420, 0.0
          %vm423 = vcmask 64512
          %424 = vst.msk [vmem:[#allocation4] sm:$0xff] %vm423, 0.0
        $region56: #{tpu_custom_call.1} parent=39 // pred_fallthru
          _
        %v425 = vld [vmem:[%s334] sm:$0xf]
        %v426 = vld [vmem:[%s343] sm:$0xf]
        %vm427 = vcmask 64512
        %v429 = vsel %vm427, %v425, 0
        %v432 = vsel %vm427, %v426, 0
        %434 = vmatprep.subr.bf16.mxu0 0
        %435 = vmatpush1.bf16.xpose.msra.mxu0 %v432
        %436 = vmatprep.subr.bf16.mxu0 0
        %437 = vmatpush1.bf16.xpose.msra.mxu0 0
        %438 = vmatprep.subr.bf16.mxu0 0
        %439 = vmatpush1.bf16.xpose.msra.mxu0 0
        %440 = vmatprep.subr.bf16.mxu0 0
        %441 = vmatpush1.bf16.xpose.msra.mxu0 0
        %442 = vmatprep.subr.bf16.mxu0 0
        %443 = vmatpush1.bf16.xpose.msra.mxu0 0
        %444 = vmatprep.subr.bf16.mxu0 0
        %445 = vmatpush1.bf16.xpose.msra.mxu0 0
        %446 = vmatprep.subr.bf16.mxu0 0
        %447 = vmatpush1.bf16.xpose.msra.mxu0 0
        %448 = vmatprep.subr.bf16.mxu0 0
        %449 = vmatpush1.bf16.xpose.msra.mxu0 0
        %450 = vmatprep.subr.bf16.mxu0 0
        %451 = vmatpush1.bf16.xpose.msra.mxu0 0
        %452 = vmatprep.subr.bf16.mxu0 0
        %453 = vmatpush1.bf16.xpose.msra.mxu0 0
        %454 = vmatprep.subr.bf16.mxu0 0
        %455 = vmatpush1.bf16.xpose.msra.mxu0 0
        %456 = vmatprep.subr.bf16.mxu0 0
        %457 = vmatpush1.bf16.xpose.msra.mxu0 0
        %458 = vmatprep.subr.bf16.mxu0 0
        %459 = vmatpush1.bf16.xpose.msra.mxu0 0
        %460 = vmatprep.subr.bf16.mxu0 0
        %461 = vmatpush1.bf16.xpose.msra.mxu0 0
        %462 = vmatprep.subr.bf16.mxu0 0
        %463 = vmatpush1.bf16.xpose.msra.mxu0 0
        %464 = vmatprep.subr.bf16.mxu0 0
        %465 = vmatpush1.bf16.xpose.msra.mxu0 0
        %466 = vmatprep.mubr.bf16.mxu0 0
        %467 = vmatmul.mubr.bf16.gmra.mrb[0].mxu0 %v429
        %v468 = vpop.f32.mrb[0].mxu0
        %v469 = vadd.f32 0.0, %v468
        %v470 = vpop.f32.mrb[0].mxu0
        %v471 = vpop.f32.mrb[0].mxu0
        %v472 = vpop.f32.mrb[0].mxu0
        %473 = vdwg.mxu0
        %v474 = vmul.f32 %v469, 0.35355338
        %v475 = vld [vmem:[%s407] sm:$0x1]
        %v477 = vlaneseq
        %v478 = vshrl.u32 %v477, 7
        %v479 = vsub.s32 0, %v478
        %v480 = vrot.slane %v475, %v479
        %v482 = vadd.f32 %v474, %v480
        %v483 = vld [vmem:[#allocation2] sm:$0xff]
        %v484 = vsel %vm427, %v482, -inf
        %485 = vmax.xlane.f32.xlu0 %v484
        %v486 = vpop.xlane.xlu0 %485
        %v487 = vmax.f32 %v483, %v486
        %v488 = vsub.f32 %v483, %v487
        %v489 = vmul.f32 %v488, 1.442695
        %v490 = vpow.pop %v489
        %492 = vset.pattern.permute.xlu0 0
        %493 = vperm.xlu0 %492, %v487
        %v494 = vpop.permute.xlu0 %493
        %v496 = vsub.f32 %v482, %v494
        %v497 = vmul.f32 %v496, 1.442695
        %v498 = vpow.pop %v497
        %v499 = vld [vmem:[#allocation3] sm:$0xff]
        %v500 = vmul.f32 %v490, %v499
        %v501 = vsel %vm427, %v498, 0.0
        %502 = vadd.xlane.f32.xlu0 %v501
        %v503 = vpop.xlane.xlu0 %502
        %v504 = vadd.f32 %v500, %v503
        %vm505 = vcmask 7168
        %506 = vst.msk [vmem:[#allocation3] sm:$0xff] %vm505, %v504
        %507 = vst.msk [vmem:[#allocation2] sm:$0xff] %vm505, %v487
        %508 = vst.msk [vmem:[#allocation5] sm:$0xff] %vm427, %v498
        %p509 = scmp.eq.s32.totalorder %s32, 1
        // Predicated region
        $region57: #{tpu_custom_call.1} parent=39 // pred_check
          %p510 = pneg %p509
        $region58: #{tpu_custom_call.1} parent=39 // pred_check_branch
          %512 = sbr.rel (%p510) target = $region60
        $region59: #{tpu_custom_call.1} parent=39 // pred_region
          %v513 = vld [vmem:[#allocation5] sm:$0xff]
          %v514 = vld [vmem:[%s414] sm:$0xff]
          %v515 = vmul.f32 %v513, %v514
          %516 = vst.msk [vmem:[#allocation5] sm:$0xff] %vm427, %v515
        $region60: #{tpu_custom_call.1} parent=39 // pred_fallthru
          _
        %v517 = vld [vmem:[#allocation4] sm:$0xff]
        %519 = vset.pattern.permute.xlu0 0
        %520 = vperm.xlu0 %519, %v490
        %v521 = vpop.permute.xlu0 %520
        %v523 = vmul.f32 %v521, %v517
        %v524 = vld [vmem:[#allocation5] sm:$0xff]
        %v525 = vpack.c.bf16 %v524, %v524
        %v526 = vld [vmem:[%s352] sm:$0xf]
        %v528 = vsel %vm427, %v525, 0
        %vm530 = vcmask 1043456
        %v532 = vsel %vm530, %v526, 0
        %534 = vmatprep.subr.bf16.mxu0 0
        %535 = vmatpush1.bf16.msra.mxu0 %v532
        %536 = vmatprep.subr.bf16.mxu0 0
        %537 = vmatpush1.bf16.msra.mxu0 0
        %538 = vmatprep.subr.bf16.mxu0 0
        %539 = vmatpush1.bf16.msra.mxu0 0
        %540 = vmatprep.subr.bf16.mxu0 0
        %541 = vmatpush1.bf16.msra.mxu0 0
        %542 = vmatprep.subr.bf16.mxu0 0
        %543 = vmatpush1.bf16.msra.mxu0 0
        %544 = vmatprep.subr.bf16.mxu0 0
        %545 = vmatpush1.bf16.msra.mxu0 0
        %546 = vmatprep.subr.bf16.mxu0 0
        %547 = vmatpush1.bf16.msra.mxu0 0
        %548 = vmatprep.subr.bf16.mxu0 0
        %549 = vmatpush1.bf16.msra.mxu0 0
        %550 = vmatprep.subr.bf16.mxu0 0
        %551 = vmatpush1.bf16.msra.mxu0 0
        %552 = vmatprep.subr.bf16.mxu0 0
        %553 = vmatpush1.bf16.msra.mxu0 0
        %554 = vmatprep.subr.bf16.mxu0 0
        %555 = vmatpush1.bf16.msra.mxu0 0
        %556 = vmatprep.subr.bf16.mxu0 0
        %557 = vmatpush1.bf16.msra.mxu0 0
        %558 = vmatprep.subr.bf16.mxu0 0
        %559 = vmatpush1.bf16.msra.mxu0 0
        %560 = vmatprep.subr.bf16.mxu0 0
        %561 = vmatpush1.bf16.msra.mxu0 0
        %562 = vmatprep.subr.bf16.mxu0 0
        %563 = vmatpush1.bf16.msra.mxu0 0
        %564 = vmatprep.subr.bf16.mxu0 0
        %565 = vmatpush1.bf16.msra.mxu0 0
        %566 = vmatprep.mubr.bf16.mxu0 0
        %567 = vmatmul.mubr.bf16.gmra.mrb[0].mxu0 %v528
        %v568 = vpop.f32.mrb[0].mxu0
        %v569 = vadd.f32 0.0, %v568
        %v570 = vpop.f32.mrb[0].mxu0
        %v571 = vpop.f32.mrb[0].mxu0
        %v572 = vpop.f32.mrb[0].mxu0
        %573 = vdwg.mxu0
        %v574 = vadd.f32 %v523, %v569
        %575 = vst.msk [vmem:[#allocation4] sm:$0xff] %vm427, %v574
        // Predicated region
        $region61: #{tpu_custom_call.1} parent=39 // pred_check
          %p576 = pneg %p416
        $region62: #{tpu_custom_call.1} parent=39 // pred_check_branch
          %578 = sbr.rel (%p576) target = $region64
        $region63: #{tpu_custom_call.1} parent=39 // pred_region
          %v579 = vld [vmem:[#allocation3] sm:$0xff]
          %v580 = vrcp.pop %v579
          %v581 = vld [vmem:[#allocation4] sm:$0xff]
          %583 = vset.pattern.permute.xlu0 0
          %584 = vperm.xlu0 %583, %v580
          %v585 = vpop.permute.xlu0 %584
          %v587 = vmul.f32 %v581, %v585
          %588 = vst.msk [vmem:[%s401] sm:$0xff] %vm427, %v587
        $region64: #{tpu_custom_call.1} parent=39 // pred_fallthru
          _
        %s589 = sand.u32 %s209, 1
        %s590 = scalar_lea.sflag [#allocation8], %s589
        %s591 = sand.u32 %s209, 1
        %s592 = smul.addr %s591, 8
        %s593 = scalar_lea.vmem [#allocation12], %s592
        // Predicated region
        $region65: #{tpu_custom_call.1} parent=39 // pred_check
          %p594 = pneg %p219
        $region66: #{tpu_custom_call.1} parent=39 // pred_check_branch
          %596 = sbr.rel (%p594) target = $region68
        $region67: #{tpu_custom_call.1} parent=39 // pred_region
          %s598 = ssub.s32 128, 128
          %599 = vsyncadd %s590, %s598
          %s600 = sadd.s32 %s33, %s32
          %s601 = smul.addr %s31, 4
          %s602 = sadd.s32 %s600, %s601
          %s603 = smul.addr %s602, 128
          %s604 = scalar_lea.hbm %s5, %s603
          %s606 = sshll.u32 %s593, 4
          %s607 = int_to_ptr.vmem [resolvable:$true] %s606
          %609 = dma.vmem_to_hbm [thread:$0]  %s607, 128, %s604, %s590
        $region68: #{tpu_custom_call.1} parent=39 // pred_fallthru
          _
      $region40: #{tpu_custom_call.1} parent=5 // pred_fallthru
        _
      %p610 = scmp.le.s32.totalorder 2, %s20
      // Predicated region
      $region69: #{tpu_custom_call.1} parent=5 // pred_check
        %p611 = pneg %p610
      $region70: #{tpu_custom_call.1} parent=5 // pred_check_branch
        %613 = sbr.rel (%p611) target = $region72
      $region71: #{tpu_custom_call.1} parent=5 // pred_region
        %s614 = ssub.s32 %s20, 2
        // Predicated region
        $region73: #{tpu_custom_call.1} parent=71 // pred_check
          %p615 = pneg %p225
        $region74: #{tpu_custom_call.1} parent=71 // pred_check_branch
          %617 = sbr.rel (%p615) target = $region76
        $region75: #{tpu_custom_call.1} parent=71 // pred_region
          %s618 = sand.u32 %s210, 1
          %s619 = scalar_lea.sflag [#allocation8], %s618
          %s620 = sand.u32 %s210, 1
          %s621 = smul.addr %s620, 8
          %s622 = scalar_lea.vmem [#allocation12], %s621
          %623 = dma.done %s619, 128
        $region76: #{tpu_custom_call.1} parent=71 // pred_fallthru
          _
      $region72: #{tpu_custom_call.1} parent=5 // pred_fallthru
        _
    $region6: #{tpu_custom_call.1} parent=1 // loop_footer
      %s24 = sadd.s32 1, %s20
    $region7: #{tpu_custom_call.1} parent=1 // loop_footer_branch
      %19 = sbr.rel target = $region3
    $region8: #{tpu_custom_call.1} parent=1 // loop_exit
      _
    %624 = vsyncpa [#allocation7], 1
    %s625 = scalar_lea.sflag [#allocation7], 1
    %626 = vsyncpa %s625, 1
    %627 = vsyncpa [#allocation10], 1
    %s628 = scalar_lea.sflag [#allocation10], 1
    %629 = vsyncpa %s628, 1
    %630 = vsyncpa [#allocation8], 1
    %s631 = scalar_lea.sflag [#allocation8], 1
    %632 = vsyncpa %s631, 1

</llo_original>
